<compile_context>
chip_gen: v5e
topology: v5e:2x2
jax: 0.10.0
libtpu: 0.0.40
codegen_flags: <defaults>
</compile_context>

<pallas_src>
import jax
import jax.numpy as jnp
from jax import lax
from jax.experimental import pallas as pl
from jax.experimental.pallas import tpu as pltpu

EPS = 1e-5
INV_SQRT2 = 0.7071067811865476


def _cdiv(a, b):
    return -(-a // b)


def _gelu(x):
    # exact GELU (erf), matching torch.nn.GELU() default.  The tanh
    # approximation would route through the EUP (separate VLIW slot, ~free next
    # to VPU work) but loses erf bit-parity, so it is not used here.
    return 0.5 * x * (1.0 + lax.erf(x * INV_SQRT2))


def _batchnorm_train(y, gamma, beta):
    # Training-mode BatchNorm1d with per-instance batch stats (reduce over the
    # batch axis=1), folded into a single fused scale/shift VPU pass.
    mu = jnp.mean(y, axis=1, keepdims=True)                     # (Nb, 1, D)
    var = jnp.mean(jnp.square(y - mu), axis=1, keepdims=True)   # (Nb, 1, D)
    scale = gamma * lax.rsqrt(var + EPS)                        # (Nb, 1, D)
    shift = beta - mu * scale
    return y * scale + shift


def residual_block_kernel(x_ref, w1t_ref, w2t_ref, p_ref, out_ref):
    nb, b, d = x_ref.shape
    x = x_ref[...]                                              # (Nb, B, D) f32

    # packed per-feature BN params: rows 0..3 = gamma1, beta1, gamma2, beta2
    g1 = p_ref[0:1, :]
    be1 = p_ref[1:2, :]
    g2 = p_ref[2:3, :]
    be2 = p_ref[3:4, :]

    mm_dtype = w1t_ref.dtype

    # fc1 (bias dropped: cancelled by BN mean subtraction).  Collapse the
    # instance axis into the sublane axis so the MXU sees one (Nb*B, D) pass.
    h = jnp.dot(x.reshape(nb * b, d).astype(mm_dtype), w1t_ref[...],
                preferred_element_type=jnp.float32).reshape(nb, b, d)
    h = _gelu(_batchnorm_train(h, g1, be1))
    # fc2 (bias dropped likewise)
    h = jnp.dot(h.reshape(nb * b, d).astype(mm_dtype), w2t_ref[...],
                preferred_element_type=jnp.float32).reshape(nb, b, d)
    h = _batchnorm_train(h, g2, be2)
    # residual add + GELU
    out_ref[...] = _gelu(h + x.astype(jnp.float32)).astype(out_ref.dtype)


def prepare_params(w1, b1, g1, be1, w2, b2, g2, be2, matmul_dtype=jnp.float32):
    """Once-per-weight-update parameter prep, hoisted out of the per-call path.

    b1/b2 are accepted for API parity with nn.Linear but dropped: a per-feature
    bias applied immediately before training-mode BatchNorm is exactly removed
    by the mean subtraction (this would NOT hold for eval-mode/running-stats BN).
    matmul_dtype=jnp.bfloat16 is the recommended setting on v6e/v7x once the
    per-step matmul has >=128 rows (not bit-exact vs f32).
    """
    del b1, b2
    d = w1.shape[0]
    f32 = jnp.float32
    w1t = jnp.asarray(w1, f32).T.astype(matmul_dtype)           # (D, D)
    w2t = jnp.asarray(w2, f32).T.astype(matmul_dtype)           # (D, D)
    # single sublane-aligned (8, D) tile holding the four 1-D BN params
    params = (jnp.zeros((8, d), f32)
              .at[0].set(jnp.asarray(g1, f32))
              .at[1].set(jnp.asarray(be1, f32))
              .at[2].set(jnp.asarray(g2, f32))
              .at[3].set(jnp.asarray(be2, f32)))
    return w1t, w2t, params


def _choose_blocking(n, nb_max):
    g = _cdiv(n, nb_max)
    if g > 1 and g % 2 == 1:
        g += 1          # even grid -> balanced across v7x's two TensorCores
    nb = _cdiv(n, g)
    return g, nb, g * nb


def residual_block(x, w1t, w2t, params, *, nb_max=32):
    """x: (B, D) or (N, B, D) independent instances sharing the same params.

    Keep B a multiple of 8 so the in-kernel (Nb, B, D) -> (Nb*B, D) collapse is
    a free sublane-tile reshape (correct either way; perf note only).
    """
    squeeze = (x.ndim == 2)
    if squeeze:
        x = x[None]
    n, b, d = x.shape
    g, nb, n_pad = _choose_blocking(n, nb_max)
    if n_pad != n:
        # zero-padded instances are numerically safe (BN of an all-zero batch
        # stays finite: rsqrt(eps) scaled by zero-mean data) and are sliced off.
        x = jnp.pad(x, ((0, n_pad - n), (0, 0), (0, 0)))

    out = pl.pallas_call(
        residual_block_kernel,
        out_shape=jax.ShapeDtypeStruct((n_pad, b, d), x.dtype),
        grid=(g,),
        in_specs=[
            pl.BlockSpec((nb, b, d), lambda i: (i, 0, 0)),      # Nb instances/step
            # W1.T / W2.T / params are grid-resident (constant index maps).
            # Default double-buffering wastes only a few KiB at D=32, so the
            # pl.Buffered(1) hint is intentionally omitted; revisit if D grows.
            pl.BlockSpec((d, d), lambda i: (0, 0)),
            pl.BlockSpec((d, d), lambda i: (0, 0)),
            pl.BlockSpec((8, d), lambda i: (0, 0)),
        ],
        out_specs=pl.BlockSpec((nb, b, d), lambda i: (i, 0, 0)),
        compiler_params=pltpu.CompilerParams(
            dimension_semantics=("parallel",)),
    )(x, w1t, w2t, params)

    if n_pad != n:
        out = out[:n]
    if squeeze:
        out = out[0]
    return out


def residual_block_ref(x, w1, b1, g1, be1, w2, b2, g2, be2):
    # pure-JAX reference of the PyTorch forward (training-mode BN, with biases)
    def bn(y, g, b):
        mu = jnp.mean(y, axis=0, keepdims=True)
        var = jnp.mean((y - mu) ** 2, axis=0, keepdims=True)
        return (y - mu) / jnp.sqrt(var + EPS) * g + b

    gelu = lambda y: 0.5 * y * (1.0 + lax.erf(y * INV_SQRT2))
    out = x @ w1.T + b1
    out = gelu(bn(out, g1, be1))
    out = out @ w2.T + b2
    out = bn(out, g2, be2) + x
    return gelu(out)


if __name__ == "__main__":
    B, D = 8, 32  # batch=8, dim=32 (hidden size of the residual MLP block)

    key = jax.random.PRNGKey(0)
    k = jax.random.split(key, 6)
    bound = 1.0 / jnp.sqrt(D)
    # deterministic synthetic parameters (PyTorch-like init shapes)
    w1 = jax.random.uniform(k[0], (D, D), jnp.float32, -bound, bound)
    b1 = jax.random.uniform(k[1], (D,), jnp.float32, -bound, bound)
    w2 = jax.random.uniform(k[2], (D, D), jnp.float32, -bound, bound)
    b2 = jax.random.uniform(k[3], (D,), jnp.float32, -bound, bound)
    g1 = jnp.ones((D,), jnp.float32)    # bn1.weight
    be1 = jnp.zeros((D,), jnp.float32)  # bn1.bias
    g2 = jnp.ones((D,), jnp.float32)    # bn2.weight
    be2 = jnp.zeros((D,), jnp.float32)  # bn2.bias

    # weight/param prep hoisted out of the per-call path (once per weight update)
    w1t, w2t, params = prepare_params(w1, b1, g1, be1, w2, b2, g2, be2)

    # 1) module-native single instance (B, D): f32 matmuls, exact erf GELU
    x = jax.random.normal(k[4], (B, D), jnp.float32)
    out = jax.block_until_ready(residual_block(x, w1t, w2t, params))
    ref = residual_block_ref(x, w1, b1, g1, be1, w2, b2, g2, be2)
    assert out.shape == (B, D)
    assert jnp.allclose(out, ref, atol=1e-5, rtol=1e-5), "mismatch vs reference"

    # 2) many stacked independent instances: Nb=24 blocked per grid step,
    #    grid rounded to even length (4 steps) for v7x TensorCore balance
    N = 96
    x3 = jax.random.normal(k[5], (N, B, D), jnp.float32)
    out3 = jax.block_until_ready(residual_block(x3, w1t, w2t, params, nb_max=32))
    ref3 = jax.vmap(
        lambda xi: residual_block_ref(xi, w1, b1, g1, be1, w2, b2, g2, be2))(x3)
    assert out3.shape == (N, B, D)
    assert jnp.allclose(out3, ref3, atol=1e-5, rtol=1e-5), "stacked mismatch"

    # 3) bf16 matmul operands (MXU-native on v6e/v7x); f32 accumulation, so
    #    only matmul rounding differs -> looser tolerance (not bit-parity).
    w1t_bf, w2t_bf, params_bf = prepare_params(
        w1, b1, g1, be1, w2, b2, g2, be2, matmul_dtype=jnp.bfloat16)
    out3_bf = jax.block_until_ready(
        residual_block(x3, w1t_bf, w2t_bf, params_bf, nb_max=32))
    assert out3_bf.shape == (N, B, D)
    assert bool(jnp.all(jnp.isfinite(out3_bf)))
    assert jnp.allclose(out3_bf, ref3, atol=1.5e-1, rtol=0.0), "bf16 path mismatch"

    # TODO(synk): PyTorch training-mode BN also updates running_mean/running_var
    # buffers; only the forward output is reproduced here.
    print("KERNEL_OK")
</pallas_src>

<mosaic_0001>
module attributes {stable_mosaic.version = 11 : i64} {
  func.func @residual_block_kernel(%arg0: i32, %arg1: memref<1x8x32xf32, #tpu.memory_space<vmem>>, %arg2: memref<32x32xf32, #tpu.memory_space<vmem>>, %arg3: memref<32x32xf32, #tpu.memory_space<vmem>>, %arg4: memref<8x32xf32, #tpu.memory_space<vmem>>, %arg5: memref<1x8x32xf32, #tpu.memory_space<vmem>>) attributes {dimension_semantics = [#tpu.dimension_semantics<parallel>], iteration_bounds = array<i64: 1>, scalar_prefetch = 0 : i64, scratch_operands = 0 : i64, tpu.core_type = #tpu.core_type<tc>, window_params = [{transform_indices = @transform_0, window_bounds = array<i64: 1, 8, 32>}, {pipeline_mode = #tpu.pipeline_mode<synchronous>, transform_indices = @transform_1, window_bounds = array<i64: 32, 32>}, {pipeline_mode = #tpu.pipeline_mode<synchronous>, transform_indices = @transform_2, window_bounds = array<i64: 32, 32>}, {pipeline_mode = #tpu.pipeline_mode<synchronous>, transform_indices = @transform_3, window_bounds = array<i64: 8, 32>}, {transform_indices = @transform_4, window_bounds = array<i64: 1, 8, 32>}]} {
    %c0 = arith.constant 0 : index
    %c0_0 = arith.constant 0 : index
    %c0_1 = arith.constant 0 : index
    %0 = vector.load %arg1[%c0, %c0_0, %c0_1] : memref<1x8x32xf32, #tpu.memory_space<vmem>>, vector<1x8x32xf32>
    %c0_2 = arith.constant 0 : index
    %c0_3 = arith.constant 0 : index
    %1 = vector.load %arg4[%c0_2, %c0_3] : memref<8x32xf32, #tpu.memory_space<vmem>>, vector<1x32xf32>
    %c1 = arith.constant 1 : index
    %c0_4 = arith.constant 0 : index
    %2 = vector.load %arg4[%c1, %c0_4] : memref<8x32xf32, #tpu.memory_space<vmem>>, vector<1x32xf32>
    %c2 = arith.constant 2 : index
    %c0_5 = arith.constant 0 : index
    %3 = vector.load %arg4[%c2, %c0_5] : memref<8x32xf32, #tpu.memory_space<vmem>>, vector<1x32xf32>
    %c3 = arith.constant 3 : index
    %c0_6 = arith.constant 0 : index
    %4 = vector.load %arg4[%c3, %c0_6] : memref<8x32xf32, #tpu.memory_space<vmem>>, vector<1x32xf32>
    %5 = vector.shape_cast %0 : vector<1x8x32xf32> to vector<8x32xf32>
    %c0_7 = arith.constant 0 : index
    %c0_8 = arith.constant 0 : index
    %6 = vector.load %arg2[%c0_7, %c0_8] : memref<32x32xf32, #tpu.memory_space<vmem>>, vector<32x32xf32>
    %cst = arith.constant dense<0.000000e+00> : vector<8x32xf32>
    %7 = tpu.matmul %5, %6, %cst {dimension_numbers = #tpu.dot_dimension_numbers<[1], [0], [0], [1], [0, 0, 1, 1], [], []>} : vector<8x32xf32>, vector<32x32xf32>, vector<8x32xf32> -> vector<8x32xf32>
    %8 = vector.shape_cast %7 : vector<8x32xf32> to vector<1x8x32xf32>
    %cst_9 = arith.constant dense<0.000000e+00> : vector<1x32xf32>
    %9 = vector.multi_reduction <add>, %8, %cst_9 [1] : vector<1x8x32xf32> to vector<1x32xf32>
    %10 = vector.shape_cast %9 : vector<1x32xf32> to vector<1x1x32xf32>
    %cst_10 = arith.constant 8.000000e+00 : f32
    %11 = vector.broadcast %cst_10 : f32 to vector<1x1x32xf32>
    %12 = arith.divf %10, %11 : vector<1x1x32xf32>
    %13 = vector.broadcast %12 : vector<1x1x32xf32> to vector<1x8x32xf32>
    %14 = arith.subf %8, %13 : vector<1x8x32xf32>
    %15 = arith.mulf %14, %14 : vector<1x8x32xf32>
    %cst_11 = arith.constant dense<0.000000e+00> : vector<1x32xf32>
    %16 = vector.multi_reduction <add>, %15, %cst_11 [1] : vector<1x8x32xf32> to vector<1x32xf32>
    %17 = vector.shape_cast %16 : vector<1x32xf32> to vector<1x1x32xf32>
    %cst_12 = arith.constant 8.000000e+00 : f32
    %18 = vector.broadcast %cst_12 : f32 to vector<1x1x32xf32>
    %19 = arith.divf %17, %18 : vector<1x1x32xf32>
    %cst_13 = arith.constant 9.99999974E-6 : f32
    %20 = vector.broadcast %cst_13 : f32 to vector<1x1x32xf32>
    %21 = arith.addf %19, %20 : vector<1x1x32xf32>
    %22 = math.rsqrt %21 : vector<1x1x32xf32>
    %23 = vector.shape_cast %1 : vector<1x32xf32> to vector<1x1x32xf32>
    %24 = arith.mulf %23, %22 : vector<1x1x32xf32>
    %25 = arith.mulf %12, %24 : vector<1x1x32xf32>
    %26 = vector.shape_cast %2 : vector<1x32xf32> to vector<1x1x32xf32>
    %27 = arith.subf %26, %25 : vector<1x1x32xf32>
    %28 = vector.broadcast %24 : vector<1x1x32xf32> to vector<1x8x32xf32>
    %29 = arith.mulf %8, %28 : vector<1x8x32xf32>
    %30 = vector.broadcast %27 : vector<1x1x32xf32> to vector<1x8x32xf32>
    %31 = arith.addf %29, %30 : vector<1x8x32xf32>
    %cst_14 = arith.constant 5.000000e-01 : f32
    %32 = vector.broadcast %cst_14 : f32 to vector<1x8x32xf32>
    %33 = arith.mulf %32, %31 : vector<1x8x32xf32>
    %cst_15 = arith.constant 0.707106769 : f32
    %34 = vector.broadcast %cst_15 : f32 to vector<1x8x32xf32>
    %35 = arith.mulf %31, %34 : vector<1x8x32xf32>
    %36 = math.erf %35 : vector<1x8x32xf32>
    %cst_16 = arith.constant 1.000000e+00 : f32
    %37 = vector.broadcast %cst_16 : f32 to vector<1x8x32xf32>
    %38 = arith.addf %37, %36 : vector<1x8x32xf32>
    %39 = arith.mulf %33, %38 : vector<1x8x32xf32>
    %40 = vector.shape_cast %39 : vector<1x8x32xf32> to vector<8x32xf32>
    %c0_17 = arith.constant 0 : index
    %c0_18 = arith.constant 0 : index
    %41 = vector.load %arg3[%c0_17, %c0_18] : memref<32x32xf32, #tpu.memory_space<vmem>>, vector<32x32xf32>
    %cst_19 = arith.constant dense<0.000000e+00> : vector<8x32xf32>
    %42 = tpu.matmul %40, %41, %cst_19 {dimension_numbers = #tpu.dot_dimension_numbers<[1], [0], [0], [1], [0, 0, 1, 1], [], []>} : vector<8x32xf32>, vector<32x32xf32>, vector<8x32xf32> -> vector<8x32xf32>
    %43 = vector.shape_cast %42 : vector<8x32xf32> to vector<1x8x32xf32>
    %cst_20 = arith.constant dense<0.000000e+00> : vector<1x32xf32>
    %44 = vector.multi_reduction <add>, %43, %cst_20 [1] : vector<1x8x32xf32> to vector<1x32xf32>
    %45 = vector.shape_cast %44 : vector<1x32xf32> to vector<1x1x32xf32>
    %cst_21 = arith.constant 8.000000e+00 : f32
    %46 = vector.broadcast %cst_21 : f32 to vector<1x1x32xf32>
    %47 = arith.divf %45, %46 : vector<1x1x32xf32>
    %48 = vector.broadcast %47 : vector<1x1x32xf32> to vector<1x8x32xf32>
    %49 = arith.subf %43, %48 : vector<1x8x32xf32>
    %50 = arith.mulf %49, %49 : vector<1x8x32xf32>
    %cst_22 = arith.constant dense<0.000000e+00> : vector<1x32xf32>
    %51 = vector.multi_reduction <add>, %50, %cst_22 [1] : vector<1x8x32xf32> to vector<1x32xf32>
    %52 = vector.shape_cast %51 : vector<1x32xf32> to vector<1x1x32xf32>
    %cst_23 = arith.constant 8.000000e+00 : f32
    %53 = vector.broadcast %cst_23 : f32 to vector<1x1x32xf32>
    %54 = arith.divf %52, %53 : vector<1x1x32xf32>
    %cst_24 = arith.constant 9.99999974E-6 : f32
    %55 = vector.broadcast %cst_24 : f32 to vector<1x1x32xf32>
    %56 = arith.addf %54, %55 : vector<1x1x32xf32>
    %57 = math.rsqrt %56 : vector<1x1x32xf32>
    %58 = vector.shape_cast %3 : vector<1x32xf32> to vector<1x1x32xf32>
    %59 = arith.mulf %58, %57 : vector<1x1x32xf32>
    %60 = arith.mulf %47, %59 : vector<1x1x32xf32>
    %61 = vector.shape_cast %4 : vector<1x32xf32> to vector<1x1x32xf32>
    %62 = arith.subf %61, %60 : vector<1x1x32xf32>
    %63 = vector.broadcast %59 : vector<1x1x32xf32> to vector<1x8x32xf32>
    %64 = arith.mulf %43, %63 : vector<1x8x32xf32>
    %65 = vector.broadcast %62 : vector<1x1x32xf32> to vector<1x8x32xf32>
    %66 = arith.addf %64, %65 : vector<1x8x32xf32>
    %67 = arith.addf %66, %0 : vector<1x8x32xf32>
    %cst_25 = arith.constant 5.000000e-01 : f32
    %68 = vector.broadcast %cst_25 : f32 to vector<1x8x32xf32>
    %69 = arith.mulf %68, %67 : vector<1x8x32xf32>
    %cst_26 = arith.constant 0.707106769 : f32
    %70 = vector.broadcast %cst_26 : f32 to vector<1x8x32xf32>
    %71 = arith.mulf %67, %70 : vector<1x8x32xf32>
    %72 = math.erf %71 : vector<1x8x32xf32>
    %cst_27 = arith.constant 1.000000e+00 : f32
    %73 = vector.broadcast %cst_27 : f32 to vector<1x8x32xf32>
    %74 = arith.addf %73, %72 : vector<1x8x32xf32>
    %75 = arith.mulf %69, %74 : vector<1x8x32xf32>
    %c0_28 = arith.constant 0 : index
    %c0_29 = arith.constant 0 : index
    %c0_30 = arith.constant 0 : index
    %76 = vector.load %arg5[%c0_28, %c0_29, %c0_30] : memref<1x8x32xf32, #tpu.memory_space<vmem>>, vector<1x8x32xf32>
    tpu.vector_store %arg5[%c0_28, %c0_29, %c0_30], %75 {strides = array<i32>} : memref<1x8x32xf32, #tpu.memory_space<vmem>>, vector<1x8x32xf32>,
    return
  }
  func.func @transform_0(%arg0: i32) -> (i32, i32, i32) {
    %c0_i32 = arith.constant 0 : i32
    %c0_i32_0 = arith.constant 0 : i32
    %c0_i32_1 = arith.constant 0 : i32
    return %arg0, %c0_i32, %c0_i32_0 : i32, i32, i32
  }
  func.func @transform_1(%arg0: i32) -> (i32, i32) {
    %c0_i32 = arith.constant 0 : i32
    %c0_i32_0 = arith.constant 0 : i32
    %c0_i32_1 = arith.constant 0 : i32
    return %c0_i32, %c0_i32_0 : i32, i32
  }
  func.func @transform_2(%arg0: i32) -> (i32, i32) {
    %c0_i32 = arith.constant 0 : i32
    %c0_i32_0 = arith.constant 0 : i32
    %c0_i32_1 = arith.constant 0 : i32
    return %c0_i32, %c0_i32_0 : i32, i32
  }
  func.func @transform_3(%arg0: i32) -> (i32, i32) {
    %c0_i32 = arith.constant 0 : i32
    %c0_i32_0 = arith.constant 0 : i32
    %c0_i32_1 = arith.constant 0 : i32
    return %c0_i32, %c0_i32_0 : i32, i32
  }
  func.func @transform_4(%arg0: i32) -> (i32, i32, i32) {
    %c0_i32 = arith.constant 0 : i32
    %c0_i32_0 = arith.constant 0 : i32
    %c0_i32_1 = arith.constant 0 : i32
    return %arg0, %c0_i32, %c0_i32_0 : i32, i32, i32
  }
}

</mosaic_0001>

<llo_original>
// kernel: tpu_custom_call.1
$region0: #{tpu_custom_call.1}
  #allocation0 [shape = 'u32[]', space=smem, size = 0x4, offset = 0x4, fixed_abs, tag = 'smem constant byte address 0x4 - core index']
  #allocation1 [shape = 'u32[72,128]{1,0:T(1,128)}', space=vmem, size = 0x9000, scoped, tag = 'internal scratch']
  %s0 = inlined_call_operand.hbm [shape: f32[1,8,32], index: 0, kind: input, shape index: {}]
  %s1 = inlined_call_operand.hbm [shape: f32[32,32], index: 1, kind: input, shape index: {}]
  %s2 = inlined_call_operand.hbm [shape: f32[32,32], index: 2, kind: input, shape index: {}]
  %s3 = inlined_call_operand.hbm [shape: f32[8,32], index: 3, kind: input, shape index: {}]
  %s4 = inlined_call_operand.hbm [shape: f32[1,8,32], index: 4, kind: output, shape index: {}]
  %s5 = sld [smem:[#allocation0]]
  $region42: #{tpu_custom_call.1} parent=0
    _
  %s7 = ssub.s32 1, %s5
  %s8 = scalar_select 0, %s7, %s5
  $region1: #{tpu_custom_call.1} parent=0
    #allocation2 [shape = 'u8[4096]{0}', space=vmem, size = 0x1000, scoped, tag = 'input window, operand 0, single buffered']
    #allocation3 [shape = 's32[1]{0}', space=sflag, size = 0x4, scoped, tag = 'scoped memory for tpu_custom_call.1']
    #allocation4 [shape = 's32[1]{0}', space=sflag, size = 0x4, scoped, tag = 'scoped memory for tpu_custom_call.1']
    #allocation5 [shape = 'u8[16384]{0}', space=vmem, size = 0x4000, scoped, tag = 'input window, operand 1, single buffered']
    #allocation6 [shape = 's32[1]{0}', space=sflag, size = 0x4, scoped, tag = 'scoped memory for tpu_custom_call.1']
    #allocation7 [shape = 'u8[16384]{0}', space=vmem, size = 0x4000, scoped, tag = 'input window, operand 2, single buffered']
    #allocation8 [shape = 'u8[4096]{0}', space=vmem, size = 0x1000, scoped, tag = 'input window, operand 3, single buffered']
    #allocation9 [shape = 's32[1]{0}', space=sflag, size = 0x4, scoped, tag = 'scoped memory for tpu_custom_call.1']
    #allocation10 [shape = 'u8[4096]{0}', space=vmem, size = 0x1000, scoped, tag = 'output window, operand 0, single buffered']
    %9 = vsyncpa [#allocation3], 0
    %10 = vsyncpa [#allocation6], 0
    %11 = vsyncpa [#allocation9], 0
    %12 = vsyncpa [#allocation4], 0
    // Predicated region
    $region2: #{tpu_custom_call.1} parent=1 // pred_check
      _
    $region3: #{tpu_custom_call.1} parent=1 // pred_check_branch
      %14 = sbr.rel (0) target = $region5
    $region4: #{tpu_custom_call.1} parent=1 // pred_region
      %16 = vsyncadd [#allocation3], 0
      %s18 = sshll.u32 %s0, 4
      %s19 = int_to_ptr.hbm [resolvable:$true] %s18
      %s20 = sshll.u32 [#allocation2], 4
      %s21 = int_to_ptr.vmem [resolvable:$true] %s20
      %23 = dma.hbm_to_vmem [thread:$0]  %s19, 128, %s21, [#allocation3]
    $region5: #{tpu_custom_call.1} parent=1 // pred_fallthru
      _
    // Predicated region
    $region6: #{tpu_custom_call.1} parent=1 // pred_check
      _
    $region7: #{tpu_custom_call.1} parent=1 // pred_check_branch
      %25 = sbr.rel (0) target = $region9
    $region8: #{tpu_custom_call.1} parent=1 // pred_region
      %27 = vsyncadd [#allocation6], 0
      %s28 = sshll.u32 %s1, 4
      %s29 = int_to_ptr.hbm [resolvable:$true] %s28
      %s30 = sshll.u32 [#allocation5], 4
      %s31 = int_to_ptr.vmem [resolvable:$true] %s30
      %36 = dma.hbm_to_vmem [thread:$0]  %s29, 512, %s31, [#allocation6], 128, 128, 8
    $region9: #{tpu_custom_call.1} parent=1 // pred_fallthru
      _
    // Predicated region
    $region10: #{tpu_custom_call.1} parent=1 // pred_check
      _
    $region11: #{tpu_custom_call.1} parent=1 // pred_check_branch
      %38 = sbr.rel (0) target = $region13
    $region12: #{tpu_custom_call.1} parent=1 // pred_region
      %40 = vsyncadd [#allocation6], 0
      %s41 = sshll.u32 %s2, 4
      %s42 = int_to_ptr.hbm [resolvable:$true] %s41
      %s43 = sshll.u32 [#allocation7], 4
      %s44 = int_to_ptr.vmem [resolvable:$true] %s43
      %49 = dma.hbm_to_vmem [thread:$0]  %s42, 512, %s44, [#allocation6], 128, 128, 8
    $region13: #{tpu_custom_call.1} parent=1 // pred_fallthru
      _
    // Predicated region
    $region14: #{tpu_custom_call.1} parent=1 // pred_check
      _
    $region15: #{tpu_custom_call.1} parent=1 // pred_check_branch
      %51 = sbr.rel (0) target = $region17
    $region16: #{tpu_custom_call.1} parent=1 // pred_region
      %53 = vsyncadd [#allocation9], 0
      %s55 = sshll.u32 %s3, 4
      %s56 = int_to_ptr.hbm [resolvable:$true] %s55
      %s57 = sshll.u32 [#allocation8], 4
      %s58 = int_to_ptr.vmem [resolvable:$true] %s57
      %60 = dma.hbm_to_vmem [thread:$0]  %s56, 128, %s58, [#allocation9]
    $region17: #{tpu_custom_call.1} parent=1 // pred_fallthru
      _
    // Predicated region
    $region18: #{tpu_custom_call.1} parent=1 // pred_check
      _
    $region19: #{tpu_custom_call.1} parent=1 // pred_check_branch
      %62 = sbr.rel (0) target = $region21
    $region20: #{tpu_custom_call.1} parent=1 // pred_region
      %64 = dma.done [#allocation3], 128
    $region21: #{tpu_custom_call.1} parent=1 // pred_fallthru
      _
    // Predicated region
    $region22: #{tpu_custom_call.1} parent=1 // pred_check
      _
    $region23: #{tpu_custom_call.1} parent=1 // pred_check_branch
      %66 = sbr.rel (0) target = $region25
    $region24: #{tpu_custom_call.1} parent=1 // pred_region
      %68 = dma.done [#allocation6], 512
    $region25: #{tpu_custom_call.1} parent=1 // pred_fallthru
      _
    // Predicated region
    $region26: #{tpu_custom_call.1} parent=1 // pred_check
      _
    $region27: #{tpu_custom_call.1} parent=1 // pred_check_branch
      %70 = sbr.rel (0) target = $region29
    $region28: #{tpu_custom_call.1} parent=1 // pred_region
      %72 = dma.done [#allocation6], 512
    $region29: #{tpu_custom_call.1} parent=1 // pred_fallthru
      _
    // Predicated region
    $region30: #{tpu_custom_call.1} parent=1 // pred_check
      _
    $region31: #{tpu_custom_call.1} parent=1 // pred_check_branch
      %74 = sbr.rel (0) target = $region33
    $region32: #{tpu_custom_call.1} parent=1 // pred_region
      %76 = dma.done [#allocation9], 128
    $region33: #{tpu_custom_call.1} parent=1 // pred_fallthru
      _
    %v77 = vld [vmem:[#allocation2] sm:$0xff]
    %v78 = vld [vmem:[#allocation8] sm:$0x1]
    %v79 = vld [vmem:[#allocation8 + $0x1] sm:$0x1]
    %v80 = vld [vmem:[#allocation8 + $0x2] sm:$0x1]
    %v81 = vld [vmem:[#allocation8 + $0x3] sm:$0x1]
    %v82 = vld [vmem:[#allocation5] sm:$0xff]
    %v83 = vld [vmem:[#allocation5 + $0x8] sm:$0xff]
    %v84 = vld [vmem:[#allocation5 + $0x10] sm:$0xff]
    %v85 = vld [vmem:[#allocation5 + $0x18] sm:$0xff]
    %vm86 = vcmask 261120
    %v88 = vsel %vm86, %v77, 0
    %90 = vmatpush.msra.mxu0 0.0
    %91 = vmatpush.msra.mxu0 0.0
    %92 = vmatpush.msra.mxu0 0.0
    %93 = vmatpush.msra.mxu0 0.0
    %94 = vmatpush.msra.mxu0 0.0
    %95 = vmatpush.msra.mxu0 0.0
    %96 = vmatpush.msra.mxu0 0.0
    %97 = vmatpush.msra.mxu0 0.0
    %98 = vmatpush.msra.mxu0 0.0
    %99 = vmatpush.msra.mxu0 0.0
    %100 = vmatpush.msra.mxu0 0.0
    %101 = vmatpush.msra.mxu0 0.0
    %102 = vmatpush.msra.mxu0 %v85
    %103 = vmatpush.msra.mxu0 %v84
    %104 = vmatpush.msra.mxu0 %v83
    %105 = vmatpush.msra.mxu0 %v82
    %106 = vmatmul.f32.gmra.mxu0 %v88
    %v107 = vpop.f32.mrf.mxu0
    %v108 = vadd.f32 0.0, %v107
    %109 = vdwg.mxu0
    %v110 = vsel %vm86, %v108, 0.0
    %v111 = vrot.slane %v110, 4
    %v112 = vadd.f32 %v110, %v111
    %v113 = vrot.slane %v112, 2
    %v114 = vadd.f32 %v112, %v113
    %v115 = vrot.slane %v114, 1
    %v116 = vadd.f32 %v114, %v115
    %v117 = vrcp.pop 8.0
    %v118 = vmul.f32 8.0, %v117
    %v119 = vsub.f32 1.0, %v118
    %v120 = vmul.f32 %v117, %v119
    %v121 = vadd.f32 %v117, %v120
    %vm122 = vweird.f32 %v117
    %v123 = vsel %vm122, %v117, %v121
    %v124 = vmul.f32 %v116, %v123
    %v125 = vsub.f32 %v108, %v124
    %v126 = vmul.f32 %v125, %v125
    %v127 = vsel %vm86, %v126, 0.0
    %v128 = vrot.slane %v127, 4
    %v129 = vadd.f32 %v127, %v128
    %v130 = vrot.slane %v129, 2
    %v131 = vadd.f32 %v129, %v130
    %v132 = vrot.slane %v131, 1
    %v133 = vadd.f32 %v131, %v132
    %v134 = vmul.f32 %v133, %v123
    %v135 = vadd.f32 %v134, 1e-05
    %v136 = vrsqrt.pop %v135
    %v137 = vmul.f32 %v136, %v135
    %v138 = vmul.f32 %v137, %v136
    %v139 = vmul.f32 0.5, %v138
    %v140 = vsub.f32 1.5, %v139
    %v141 = vmul.f32 %v136, %v140
    %vm142 = vweird.f32 %v135
    %vm143 = vweird.f32 %v136
    %vm144 = vmor %vm142, %vm143
    %v145 = vsel %vm144, %v136, %v141
    %v146 = vmul.f32 %v78, %v145
    %v147 = vmul.f32 %v124, %v146
    %v148 = vsub.f32 %v79, %v147
    %v149 = vperm.slane %v146, 0
    %v150 = vmul.f32 %v108, %v149
    %v151 = vperm.slane %v148, 0
    %v152 = vadd.f32 %v150, %v151
    %v153 = vmul.f32 %v152, 0.5
    %v154 = vmul.f32 %v152, 0.70710677
    %v155 = vmul.f32 %v154, %v154
    %v156 = vmin.f32 16.0, %v155
    %v157 = vmul.f32 %v156, 2.1237322e-06
    %v158 = vadd.f32 %v157, 0.00028619796
    %v159 = vmul.f32 %v156, %v158
    %v160 = vadd.f32 %v159, 0.0036580483
    %v161 = vmul.f32 %v156, %v160
    %v162 = vadd.f32 %v161, 0.05243302
    %v163 = vmul.f32 %v156, %v162
    %v164 = vadd.f32 %v163, 0.18741608
    %v165 = vmul.f32 %v156, %v164
    %v166 = vadd.f32 %v165, 1.1283791
    %v167 = vmul.f32 %v154, %v166
    %v168 = vmul.f32 %v156, 3.8918573e-05
    %v169 = vadd.f32 %v168, 0.001143296
    %v170 = vmul.f32 %v156, %v169
    %v171 = vadd.f32 %v170, 0.014752088
    %v172 = vmul.f32 %v156, %v171
    %v173 = vadd.f32 %v172, 0.112945676
    %v174 = vmul.f32 %v156, %v173
    %v175 = vadd.f32 %v174, 0.4994258
    %v176 = vmul.f32 %v156, %v175
    %v177 = vadd.f32 %v176, 1.0
    %v178 = vrcp.pop %v177
    %v179 = vmul.f32 %v177, %v178
    %v180 = vsub.f32 1.0, %v179
    %v181 = vmul.f32 %v178, %v180
    %v182 = vadd.f32 %v178, %v181
    %vm183 = vweird.f32 %v177
    %vm184 = vweird.f32 %v178
    %vm185 = vmor %vm183, %vm184
    %v186 = vsel %vm185, %v178, %v182
    %v187 = vand.u32 2147483647, %v177
    %vm188 = vcmp.eq.f32.partialorder %v187, 8.507059e+37
    %v189 = vand.u32 %v177, 2147483648
    %v190 = vor.u32 1.1754944e-38, %v189
    %v191 = vsel %vm188, %v190, %v186
    %v192 = vmul.f32 %v167, %v191
    %v193 = vmin.f32 %v192, 1.0
    %v194 = vmax.f32 %v193, -1.0
    %v195 = vadd.f32 %v194, 1.0
    %v196 = vmul.f32 %v153, %v195
    %v197 = vld [vmem:[#allocation7] sm:$0xff]
    %v198 = vld [vmem:[#allocation7 + $0x8] sm:$0xff]
    %v199 = vld [vmem:[#allocation7 + $0x10] sm:$0xff]
    %v200 = vld [vmem:[#allocation7 + $0x18] sm:$0xff]
    %v202 = vsel %vm86, %v196, 0
    %204 = vmatpush.msra.mxu0 0.0
    %205 = vmatpush.msra.mxu0 0.0
    %206 = vmatpush.msra.mxu0 0.0
    %207 = vmatpush.msra.mxu0 0.0
    %208 = vmatpush.msra.mxu0 0.0
    %209 = vmatpush.msra.mxu0 0.0
    %210 = vmatpush.msra.mxu0 0.0
    %211 = vmatpush.msra.mxu0 0.0
    %212 = vmatpush.msra.mxu0 0.0
    %213 = vmatpush.msra.mxu0 0.0
    %214 = vmatpush.msra.mxu0 0.0
    %215 = vmatpush.msra.mxu0 0.0
    %216 = vmatpush.msra.mxu0 %v200
    %217 = vmatpush.msra.mxu0 %v199
    %218 = vmatpush.msra.mxu0 %v198
    %219 = vmatpush.msra.mxu0 %v197
    %220 = vmatmul.f32.gmra.mxu0 %v202
    %v221 = vpop.f32.mrf.mxu0
    %v222 = vadd.f32 0.0, %v221
    %223 = vdwg.mxu0
    %v224 = vsel %vm86, %v222, 0.0
    %v225 = vrot.slane %v224, 4
    %v226 = vadd.f32 %v224, %v225
    %v227 = vrot.slane %v226, 2
    %v228 = vadd.f32 %v226, %v227
    %v229 = vrot.slane %v228, 1
    %v230 = vadd.f32 %v228, %v229
    %v231 = vmul.f32 %v230, %v123
    %v232 = vsub.f32 %v222, %v231
    %v233 = vmul.f32 %v232, %v232
    %v234 = vsel %vm86, %v233, 0.0
    %v235 = vrot.slane %v234, 4
    %v236 = vadd.f32 %v234, %v235
    %v237 = vrot.slane %v236, 2
    %v238 = vadd.f32 %v236, %v237
    %v239 = vrot.slane %v238, 1
    %v240 = vadd.f32 %v238, %v239
    %v241 = vmul.f32 %v240, %v123
    %v242 = vadd.f32 %v241, 1e-05
    %v243 = vrsqrt.pop %v242
    %v244 = vmul.f32 %v243, %v242
    %v245 = vmul.f32 %v244, %v243
    %v246 = vmul.f32 0.5, %v245
    %v247 = vsub.f32 1.5, %v246
    %v248 = vmul.f32 %v243, %v247
    %vm249 = vweird.f32 %v242
    %vm250 = vweird.f32 %v243
    %vm251 = vmor %vm249, %vm250
    %v252 = vsel %vm251, %v243, %v248
    %v253 = vmul.f32 %v80, %v252
    %v254 = vmul.f32 %v231, %v253
    %v255 = vsub.f32 %v81, %v254
    %v256 = vperm.slane %v253, 0
    %v257 = vmul.f32 %v222, %v256
    %v258 = vperm.slane %v255, 0
    %v259 = vadd.f32 %v257, %v258
    %v260 = vadd.f32 %v259, %v77
    %v261 = vmul.f32 %v260, 0.5
    %v262 = vmul.f32 %v260, 0.70710677
    %v263 = vmul.f32 %v262, %v262
    %v264 = vmin.f32 16.0, %v263
    %v265 = vmul.f32 %v264, 2.1237322e-06
    %v266 = vadd.f32 %v265, 0.00028619796
    %v267 = vmul.f32 %v264, %v266
    %v268 = vadd.f32 %v267, 0.0036580483
    %v269 = vmul.f32 %v264, %v268
    %v270 = vadd.f32 %v269, 0.05243302
    %v271 = vmul.f32 %v264, %v270
    %v272 = vadd.f32 %v271, 0.18741608
    %v273 = vmul.f32 %v264, %v272
    %v274 = vadd.f32 %v273, 1.1283791
    %v275 = vmul.f32 %v262, %v274
    %v276 = vmul.f32 %v264, 3.8918573e-05
    %v277 = vadd.f32 %v276, 0.001143296
    %v278 = vmul.f32 %v264, %v277
    %v279 = vadd.f32 %v278, 0.014752088
    %v280 = vmul.f32 %v264, %v279
    %v281 = vadd.f32 %v280, 0.112945676
    %v282 = vmul.f32 %v264, %v281
    %v283 = vadd.f32 %v282, 0.4994258
    %v284 = vmul.f32 %v264, %v283
    %v285 = vadd.f32 %v284, 1.0
    %v286 = vrcp.pop %v285
    %v287 = vmul.f32 %v285, %v286
    %v288 = vsub.f32 1.0, %v287
    %v289 = vmul.f32 %v286, %v288
    %v290 = vadd.f32 %v286, %v289
    %vm291 = vweird.f32 %v285
    %vm292 = vweird.f32 %v286
    %vm293 = vmor %vm291, %vm292
    %v294 = vsel %vm293, %v286, %v290
    %v295 = vand.u32 2147483647, %v285
    %vm296 = vcmp.eq.f32.partialorder %v295, 8.507059e+37
    %v297 = vand.u32 %v285, 2147483648
    %v298 = vor.u32 1.1754944e-38, %v297
    %v299 = vsel %vm296, %v298, %v294
    %v300 = vmul.f32 %v275, %v299
    %v301 = vmin.f32 %v300, 1.0
    %v302 = vmax.f32 %v301, -1.0
    %v303 = vadd.f32 %v302, 1.0
    %v304 = vmul.f32 %v261, %v303
    %305 = vst.msk [vmem:[#allocation10] sm:$0xff] %vm86, %v304
    // Predicated region
    $region34: #{tpu_custom_call.1} parent=1 // pred_check
      _
    $region35: #{tpu_custom_call.1} parent=1 // pred_check_branch
      %307 = sbr.rel (0) target = $region37
    $region36: #{tpu_custom_call.1} parent=1 // pred_region
      %309 = vsyncadd [#allocation4], 0
      %s311 = sshll.u32 [#allocation10], 4
      %s312 = int_to_ptr.vmem [resolvable:$true] %s311
      %s313 = sshll.u32 %s4, 4
      %s314 = int_to_ptr.hbm [resolvable:$true] %s313
      %316 = dma.vmem_to_hbm [thread:$0]  %s312, 128, %s314, [#allocation4]
    $region37: #{tpu_custom_call.1} parent=1 // pred_fallthru
      _
    // Predicated region
    $region38: #{tpu_custom_call.1} parent=1 // pred_check
      _
    $region39: #{tpu_custom_call.1} parent=1 // pred_check_branch
      %318 = sbr.rel (0) target = $region41
    $region40: #{tpu_custom_call.1} parent=1 // pred_region
      %320 = dma.done [#allocation4], 128
    $region41: #{tpu_custom_call.1} parent=1 // pred_fallthru
      _
    %321 = vsyncpa [#allocation3], 1
    %322 = vsyncpa [#allocation6], 1
    %323 = vsyncpa [#allocation9], 1
    %324 = vsyncpa [#allocation4], 1

</llo_original>
